<compile_context>
chip_gen: v7x
topology: tpu7x:2x2x1
jax: 0.10.0
libtpu: 0.0.40
codegen_flags: <defaults>
</compile_context>

<pallas_src>
from functools import partial

import numpy as np
import jax
import jax.numpy as jnp
from jax.experimental import pallas as pl
from jax.experimental.pallas import tpu as pltpu


def _round_up(x: int, m: int) -> int:
    return ((x + m - 1) // m) * m


def _mlp_kernel(x_ref, w_ref, b_ref, o_ref, *, n_layers: int):
    # x_ref: (TILE_B, D)   w_ref: (L, D, D)   b_ref: (L, 1, D)   o_ref: (TILE_B, D)
    x = x_ref[...]
    for i in range(n_layers):                       # static unrolled layer loop
        y = jnp.dot(x, w_ref[i], preferred_element_type=jnp.float32)
        y = y + b_ref[i]                            # (1, D) broadcast bias
        x = jnp.tanh(y)                             # EUP transcendental
    o_ref[...] = x.astype(o_ref.dtype)


def _forward_impl(x, w_stack, b_stack, *, n_layers, n_inputs, n_outputs, D):
    # flatten(-2): merge the last two axes
    lead = x.shape[:-2]
    x = x.reshape(*lead, x.shape[-2] * x.shape[-1])
    x2 = x.reshape(-1, x.shape[-1])                 # (B, F)
    B, F = x2.shape
    assert F == n_inputs, (F, n_inputs)

    # Pad batch to sublane-full tiles; tile over batch for large B.
    tile_b = min(max(_round_up(B, 8), 8), 256)
    B_pad = _round_up(max(B, 8), tile_b)

    # Zero-pad activations into the lane-dense (B_pad, D) slab.
    xp = jnp.zeros((B_pad, D), x2.dtype).at[:B, :F].set(x2)

    out = pl.pallas_call(
        partial(_mlp_kernel, n_layers=n_layers),
        out_shape=jax.ShapeDtypeStruct((B_pad, D), jnp.float32),
        grid=(B_pad // tile_b,),
        in_specs=[
            pl.BlockSpec((tile_b, D), lambda i: (i, 0)),
            pl.BlockSpec((n_layers, D, D), lambda i: (0, 0, 0)),   # resident weights
            pl.BlockSpec((n_layers, 1, D), lambda i: (0, 0, 0)),   # resident biases
        ],
        out_specs=pl.BlockSpec((tile_b, D), lambda i: (i, 0)),
        compiler_params=pltpu.CompilerParams(
            dimension_semantics=("parallel",)),      # batch tiles shard across TCs
    )(xp, w_stack, b_stack)

    out = out[:B, :n_outputs]
    return out.reshape(*lead, n_outputs)


class DeepQLearningNetworkPallas:
    """MLP: n_layers x (Linear -> Tanh), dims from linspace(n_inputs, n_outputs)."""

    def __init__(self, n_inputs: int, n_outputs: int, n_layers: int, key) -> None:
        dims = np.linspace(n_inputs, n_outputs, n_layers + 1).astype(np.int64)
        self.dims = dims
        self.n_layers = n_layers
        self.n_inputs = int(dims[0])
        self.n_outputs = int(dims[-1])

        # Common padded feature dim (lane multiple of 128) shared by all layers.
        D = max(_round_up(int(d), 128) for d in dims)
        self.D = D

        self.params = []          # unpadded (w, b) for reference / export
        ws, bs = [], []
        for i in range(n_layers):
            fan_in, fan_out = int(dims[i]), int(dims[i + 1])
            key, kw, kb = jax.random.split(key, 3)
            bound = 1.0 / np.sqrt(fan_in)
            # PyTorch Linear stores (out, in); we keep (in, out) so y = x @ W + b
            w = jax.random.uniform(kw, (fan_in, fan_out), jnp.float32,
                                   minval=-bound, maxval=bound)
            b = jax.random.uniform(kb, (fan_out,), jnp.float32,
                                   minval=-bound, maxval=bound)
            self.params.append((w, b))
            # Zero-padded copies: padded rows/cols/bias are zero so padding
            # stays exactly zero through every tanh.
            ws.append(jnp.zeros((D, D), jnp.float32).at[:fan_in, :fan_out].set(w))
            bs.append(jnp.zeros((1, D), jnp.float32).at[0, :fan_out].set(b))

        self.w_stack = jnp.stack(ws)    # (L, D, D)
        self.b_stack = jnp.stack(bs)    # (L, 1, D)

        self._forward = jax.jit(partial(
            _forward_impl, n_layers=n_layers, n_inputs=self.n_inputs,
            n_outputs=self.n_outputs, D=D))

    def __call__(self, x):
        return self._forward(x, self.w_stack, self.b_stack)


if __name__ == "__main__":
    key = jax.random.PRNGKey(0)
    k_in, k_model = jax.random.split(key)

    # Small shapes consistent with forward(): trailing (H, W) flattens to
    # n_inputs features; batch of 8 fills the sublanes of every vreg.
    B, H, W = 8, 8, 8
    n_inputs = H * W            # 64
    n_outputs = 8
    n_layers = 2                # dims = [64, 36, 8]

    x = jax.random.normal(k_in, (B, H, W), dtype=jnp.float32)

    model = DeepQLearningNetworkPallas(n_inputs, n_outputs, n_layers, k_model)
    out = jax.block_until_ready(model(x))

    # Reference check in plain JAX (unpadded weights).
    ref = x.reshape(B, H * W)
    for w, b in model.params:
        ref = jnp.tanh(ref @ w + b)
    assert out.shape == (B, n_outputs), out.shape
    assert jnp.allclose(out, ref, atol=1e-5, rtol=1e-5)

    print("KERNEL_OK")
</pallas_src>

<mosaic_0001>
module attributes {stable_mosaic.version = 11 : i64} {
  func.func @_mlp_kernel(%arg0: i32, %arg1: memref<8x128xf32, #tpu.memory_space<vmem>>, %arg2: memref<2x128x128xf32, #tpu.memory_space<vmem>>, %arg3: memref<2x1x128xf32, #tpu.memory_space<vmem>>, %arg4: memref<8x128xf32, #tpu.memory_space<vmem>>) attributes {dimension_semantics = [#tpu.dimension_semantics<parallel>], iteration_bounds = array<i64: 1>, scalar_prefetch = 0 : i64, scratch_operands = 0 : i64, tpu.core_type = #tpu.core_type<tc>, window_params = [{transform_indices = @transform_0, window_bounds = array<i64: 8, 128>}, {pipeline_mode = #tpu.pipeline_mode<synchronous>, transform_indices = @transform_1, window_bounds = array<i64: 2, 128, 128>}, {pipeline_mode = #tpu.pipeline_mode<synchronous>, transform_indices = @transform_2, window_bounds = array<i64: 2, 1, 128>}, {transform_indices = @transform_3, window_bounds = array<i64: 8, 128>}]} {
    %c0 = arith.constant 0 : index
    %c0_0 = arith.constant 0 : index
    %0 = vector.load %arg1[%c0, %c0_0] : memref<8x128xf32, #tpu.memory_space<vmem>>, vector<8x128xf32>
    %c0_1 = arith.constant 0 : index
    %c0_2 = arith.constant 0 : index
    %c0_3 = arith.constant 0 : index
    %1 = vector.load %arg2[%c0_1, %c0_2, %c0_3] : memref<2x128x128xf32, #tpu.memory_space<vmem>>, vector<1x128x128xf32>
    %2 = vector.shape_cast %1 : vector<1x128x128xf32> to vector<128x128xf32>
    %cst = arith.constant dense<0.000000e+00> : vector<8x128xf32>
    %3 = tpu.matmul %0, %2, %cst {dimension_numbers = #tpu.dot_dimension_numbers<[1], [0], [0], [1], [0, 0, 1, 1], [], []>} : vector<8x128xf32>, vector<128x128xf32>, vector<8x128xf32> -> vector<8x128xf32>
    %c0_4 = arith.constant 0 : index
    %c0_5 = arith.constant 0 : index
    %c0_6 = arith.constant 0 : index
    %4 = vector.load %arg3[%c0_4, %c0_5, %c0_6] : memref<2x1x128xf32, #tpu.memory_space<vmem>>, vector<1x1x128xf32>
    %5 = vector.shape_cast %4 : vector<1x1x128xf32> to vector<1x128xf32>
    %6 = vector.broadcast %5 : vector<1x128xf32> to vector<8x128xf32>
    %7 = arith.addf %3, %6 : vector<8x128xf32>
    %8 = math.tanh %7 : vector<8x128xf32>
    %c1 = arith.constant 1 : index
    %c0_7 = arith.constant 0 : index
    %c0_8 = arith.constant 0 : index
    %9 = vector.load %arg2[%c1, %c0_7, %c0_8] : memref<2x128x128xf32, #tpu.memory_space<vmem>>, vector<1x128x128xf32>
    %10 = vector.shape_cast %9 : vector<1x128x128xf32> to vector<128x128xf32>
    %cst_9 = arith.constant dense<0.000000e+00> : vector<8x128xf32>
    %11 = tpu.matmul %8, %10, %cst_9 {dimension_numbers = #tpu.dot_dimension_numbers<[1], [0], [0], [1], [0, 0, 1, 1], [], []>} : vector<8x128xf32>, vector<128x128xf32>, vector<8x128xf32> -> vector<8x128xf32>
    %c1_10 = arith.constant 1 : index
    %c0_11 = arith.constant 0 : index
    %c0_12 = arith.constant 0 : index
    %12 = vector.load %arg3[%c1_10, %c0_11, %c0_12] : memref<2x1x128xf32, #tpu.memory_space<vmem>>, vector<1x1x128xf32>
    %13 = vector.shape_cast %12 : vector<1x1x128xf32> to vector<1x128xf32>
    %14 = vector.broadcast %13 : vector<1x128xf32> to vector<8x128xf32>
    %15 = arith.addf %11, %14 : vector<8x128xf32>
    %16 = math.tanh %15 : vector<8x128xf32>
    %c0_13 = arith.constant 0 : index
    %c0_14 = arith.constant 0 : index
    %17 = vector.load %arg4[%c0_13, %c0_14] : memref<8x128xf32, #tpu.memory_space<vmem>>, vector<8x128xf32>
    tpu.vector_store %arg4[%c0_13, %c0_14], %16 {strides = array<i32>} : memref<8x128xf32, #tpu.memory_space<vmem>>, vector<8x128xf32>,
    return
  }
  func.func @transform_0(%arg0: i32) -> (i32, i32) {
    %c0_i32 = arith.constant 0 : i32
    %c0_i32_0 = arith.constant 0 : i32
    return %arg0, %c0_i32 : i32, i32
  }
  func.func @transform_1(%arg0: i32) -> (i32, i32, i32) {
    %c0_i32 = arith.constant 0 : i32
    %c0_i32_0 = arith.constant 0 : i32
    %c0_i32_1 = arith.constant 0 : i32
    %c0_i32_2 = arith.constant 0 : i32
    return %c0_i32, %c0_i32_0, %c0_i32_1 : i32, i32, i32
  }
  func.func @transform_2(%arg0: i32) -> (i32, i32, i32) {
    %c0_i32 = arith.constant 0 : i32
    %c0_i32_0 = arith.constant 0 : i32
    %c0_i32_1 = arith.constant 0 : i32
    %c0_i32_2 = arith.constant 0 : i32
    return %c0_i32, %c0_i32_0, %c0_i32_1 : i32, i32, i32
  }
  func.func @transform_3(%arg0: i32) -> (i32, i32) {
    %c0_i32 = arith.constant 0 : i32
    %c0_i32_0 = arith.constant 0 : i32
    return %arg0, %c0_i32 : i32, i32
  }
}

</mosaic_0001>

<llo_original>
// kernel: _forward_impl.1
$region0: #{_forward_impl.1}
  #allocation0 [shape = 'u32[]', space=smem, size = 0x4, offset = 0x4, fixed_abs, tag = 'smem constant byte address 0x4 - core index']
  #allocation1 [shape = 'u32[144,128]{1,0:T(1,128)}', space=vmem, size = 0x12000, scoped, tag = 'internal scratch']
  %s0 = inlined_call_operand.vmem [shape: f32[8,128], index: 0, kind: input, shape index: {}]
  %s1 = inlined_call_operand.hbm [shape: f32[2,128,128], index: 1, kind: input, shape index: {}]
  %s2 = inlined_call_operand.vmem [shape: f32[2,1,128], index: 2, kind: input, shape index: {}]
  %s3 = inlined_call_operand.hbm [shape: f32[8,128], index: 3, kind: output, shape index: {}]
  %s4 = sld [smem:[#allocation0]]
  $region26: #{_forward_impl.1} parent=0
    _
  %s6 = ssub.s32 1, %s4
  %s7 = scalar_select 0, %s6, %s4
  $region1: #{_forward_impl.1} parent=0
    #allocation2 [shape = 'u8[131072]{0}', space=vmem, size = 0x20000, scoped, tag = 'input window, operand 1, single buffered']
    #allocation3 [shape = 's32[1]{0}', space=sflag, size = 0x4, scoped, tag = 'scoped memory for _forward_impl.1']
    #allocation4 [shape = 's32[1]{0}', space=sflag, size = 0x4, scoped, tag = 'scoped memory for _forward_impl.1']
    #allocation5 [shape = 'u8[4096]{0}', space=vmem, size = 0x1000, scoped, tag = 'output window, operand 0, single buffered']
    %8 = vsyncpa [#allocation3], 0
    %9 = vsyncpa [#allocation4], 0
    // Predicated region
    $region2: #{_forward_impl.1} parent=1 // pred_check
      _
    $region3: #{_forward_impl.1} parent=1 // pred_check_branch
      %11 = sbr.rel (0) target = $region5
    $region4: #{_forward_impl.1} parent=1 // pred_region
      _
    $region5: #{_forward_impl.1} parent=1 // pred_fallthru
      _
    // Predicated region
    $region6: #{_forward_impl.1} parent=1 // pred_check
      _
    $region7: #{_forward_impl.1} parent=1 // pred_check_branch
      %13 = sbr.rel (0) target = $region9
    $region8: #{_forward_impl.1} parent=1 // pred_region
      %s15 = ssub.s32 4096, 4096
      %16 = vsyncadd [#allocation3], %s15
      %s17 = sshll.u32 [#allocation2], 4
      %s18 = int_to_ptr.vmem [resolvable:$true] %s17
      %23 = dma.hbm_to_vmem [thread:$0]  %s1, 4096, %s18, [#allocation3], 128, 128, 8
    $region9: #{_forward_impl.1} parent=1 // pred_fallthru
      _
    // Predicated region
    $region10: #{_forward_impl.1} parent=1 // pred_check
      _
    $region11: #{_forward_impl.1} parent=1 // pred_check_branch
      %25 = sbr.rel (0) target = $region13
    $region12: #{_forward_impl.1} parent=1 // pred_region
      _
    $region13: #{_forward_impl.1} parent=1 // pred_fallthru
      _
    // Predicated region
    $region14: #{_forward_impl.1} parent=1 // pred_check
      _
    $region15: #{_forward_impl.1} parent=1 // pred_check_branch
      %27 = sbr.rel (0) target = $region17
    $region16: #{_forward_impl.1} parent=1 // pred_region
      %28 = dma.done [#allocation3], 4096
    $region17: #{_forward_impl.1} parent=1 // pred_fallthru
      _
    %v29 = vld [vmem:[%s0] sm:$0xff]
    %v30 = vld [vmem:[#allocation2] sm:$0xff]
    %v31 = vld [vmem:[#allocation2 + $0x8] sm:$0xff]
    %v32 = vld [vmem:[#allocation2 + $0x10] sm:$0xff]
    %v33 = vld [vmem:[#allocation2 + $0x18] sm:$0xff]
    %v34 = vld [vmem:[#allocation2 + $0x20] sm:$0xff]
    %v35 = vld [vmem:[#allocation2 + $0x28] sm:$0xff]
    %v36 = vld [vmem:[#allocation2 + $0x30] sm:$0xff]
    %v37 = vld [vmem:[#allocation2 + $0x38] sm:$0xff]
    %v38 = vld [vmem:[#allocation2 + $0x40] sm:$0xff]
    %v39 = vld [vmem:[#allocation2 + $0x48] sm:$0xff]
    %v40 = vld [vmem:[#allocation2 + $0x50] sm:$0xff]
    %v41 = vld [vmem:[#allocation2 + $0x58] sm:$0xff]
    %v42 = vld [vmem:[#allocation2 + $0x60] sm:$0xff]
    %v43 = vld [vmem:[#allocation2 + $0x68] sm:$0xff]
    %v44 = vld [vmem:[#allocation2 + $0x70] sm:$0xff]
    %v45 = vld [vmem:[#allocation2 + $0x78] sm:$0xff]
    %v46 = vld [vmem:[%s2] sm:$0x1]
    %v48 = vlaneseq
    %v49 = vshrl.u32 %v48, 7
    %v50 = vsub.s32 0, %v49
    %v51 = vrot.slane %v46, %v50
    %53 = vmatprep.subr.mxu0 0.0
    %54 = vmatpush1.msra.mxu0 %v30
    %55 = vmatprep.subr.mxu0 0.0
    %56 = vmatpush1.msra.mxu0 %v31
    %57 = vmatprep.subr.mxu0 0.0
    %58 = vmatpush1.msra.mxu0 %v32
    %59 = vmatprep.subr.mxu0 0.0
    %60 = vmatpush1.msra.mxu0 %v33
    %61 = vmatprep.subr.mxu0 0.0
    %62 = vmatpush1.msra.mxu0 %v34
    %63 = vmatprep.subr.mxu0 0.0
    %64 = vmatpush1.msra.mxu0 %v35
    %65 = vmatprep.subr.mxu0 0.0
    %66 = vmatpush1.msra.mxu0 %v36
    %67 = vmatprep.subr.mxu0 0.0
    %68 = vmatpush1.msra.mxu0 %v37
    %69 = vmatprep.subr.mxu0 0.0
    %70 = vmatpush1.msra.mxu0 %v38
    %71 = vmatprep.subr.mxu0 0.0
    %72 = vmatpush1.msra.mxu0 %v39
    %73 = vmatprep.subr.mxu0 0.0
    %74 = vmatpush1.msra.mxu0 %v40
    %75 = vmatprep.subr.mxu0 0.0
    %76 = vmatpush1.msra.mxu0 %v41
    %77 = vmatprep.subr.mxu0 0.0
    %78 = vmatpush1.msra.mxu0 %v42
    %79 = vmatprep.subr.mxu0 0.0
    %80 = vmatpush1.msra.mxu0 %v43
    %81 = vmatprep.subr.mxu0 0.0
    %82 = vmatpush1.msra.mxu0 %v44
    %83 = vmatprep.subr.mxu0 0.0
    %84 = vmatpush1.msra.mxu0 %v45
    %85 = vmatprep.subr.mxu0 0.0
    %86 = vmatpush1.msra.mxu0 0.0
    %87 = vmatprep.subr.mxu0 0.0
    %88 = vmatpush1.msra.mxu0 0.0
    %89 = vmatprep.subr.mxu0 0.0
    %90 = vmatpush1.msra.mxu0 0.0
    %91 = vmatprep.subr.mxu0 0.0
    %92 = vmatpush1.msra.mxu0 0.0
    %93 = vmatprep.subr.mxu0 0.0
    %94 = vmatpush1.msra.mxu0 0.0
    %95 = vmatprep.subr.mxu0 0.0
    %96 = vmatpush1.msra.mxu0 0.0
    %97 = vmatprep.subr.mxu0 0.0
    %98 = vmatpush1.msra.mxu0 0.0
    %99 = vmatprep.subr.mxu0 0.0
    %100 = vmatpush1.msra.mxu0 0.0
    %101 = vmatprep.subr.mxu0 0.0
    %102 = vmatpush1.msra.mxu0 0.0
    %103 = vmatprep.subr.mxu0 0.0
    %104 = vmatpush1.msra.mxu0 0.0
    %105 = vmatprep.subr.mxu0 0.0
    %106 = vmatpush1.msra.mxu0 0.0
    %107 = vmatprep.subr.mxu0 0.0
    %108 = vmatpush1.msra.mxu0 0.0
    %109 = vmatprep.subr.mxu0 0.0
    %110 = vmatpush1.msra.mxu0 0.0
    %111 = vmatprep.subr.mxu0 0.0
    %112 = vmatpush1.msra.mxu0 0.0
    %113 = vmatprep.subr.mxu0 0.0
    %114 = vmatpush1.msra.mxu0 0.0
    %115 = vmatprep.subr.mxu0 0.0
    %116 = vmatpush1.msra.mxu0 0.0
    %117 = vmatprep.mubr.f32.mxu0 0.0
    %118 = vmatmul.mubr.f32.gmra.mrb[0].mxu0 %v29
    %v119 = vpop.f32.mrb[0].mxu0
    %v120 = vadd.f32 %v51, %v119
    %v121 = vpop.f32.mrb[0].mxu0
    %122 = vdwg.mxu0
    %v123 = vtanh.pop %v120
    %s124 = scalar_lea.vmem [#allocation2], 128
    %v125 = vld [vmem:[%s124] sm:$0xff]
    %v126 = vld [vmem:[%s124 + $0x8] sm:$0xff]
    %v127 = vld [vmem:[%s124 + $0x10] sm:$0xff]
    %v128 = vld [vmem:[%s124 + $0x18] sm:$0xff]
    %v129 = vld [vmem:[%s124 + $0x20] sm:$0xff]
    %v130 = vld [vmem:[%s124 + $0x28] sm:$0xff]
    %v131 = vld [vmem:[%s124 + $0x30] sm:$0xff]
    %v132 = vld [vmem:[%s124 + $0x38] sm:$0xff]
    %v133 = vld [vmem:[%s124 + $0x40] sm:$0xff]
    %v134 = vld [vmem:[%s124 + $0x48] sm:$0xff]
    %v135 = vld [vmem:[%s124 + $0x50] sm:$0xff]
    %v136 = vld [vmem:[%s124 + $0x58] sm:$0xff]
    %v137 = vld [vmem:[%s124 + $0x60] sm:$0xff]
    %v138 = vld [vmem:[%s124 + $0x68] sm:$0xff]
    %v139 = vld [vmem:[%s124 + $0x70] sm:$0xff]
    %v140 = vld [vmem:[%s124 + $0x78] sm:$0xff]
    %s141 = scalar_lea.vmem %s2, 1
    %v142 = vld [vmem:[%s141] sm:$0x1]
    %v144 = vlaneseq
    %v145 = vshrl.u32 %v144, 7
    %v146 = vsub.s32 0, %v145
    %v147 = vrot.slane %v142, %v146
    %149 = vmatprep.subr.mxu0 0.0
    %150 = vmatpush1.msra.mxu0 %v125
    %151 = vmatprep.subr.mxu0 0.0
    %152 = vmatpush1.msra.mxu0 %v126
    %153 = vmatprep.subr.mxu0 0.0
    %154 = vmatpush1.msra.mxu0 %v127
    %155 = vmatprep.subr.mxu0 0.0
    %156 = vmatpush1.msra.mxu0 %v128
    %157 = vmatprep.subr.mxu0 0.0
    %158 = vmatpush1.msra.mxu0 %v129
    %159 = vmatprep.subr.mxu0 0.0
    %160 = vmatpush1.msra.mxu0 %v130
    %161 = vmatprep.subr.mxu0 0.0
    %162 = vmatpush1.msra.mxu0 %v131
    %163 = vmatprep.subr.mxu0 0.0
    %164 = vmatpush1.msra.mxu0 %v132
    %165 = vmatprep.subr.mxu0 0.0
    %166 = vmatpush1.msra.mxu0 %v133
    %167 = vmatprep.subr.mxu0 0.0
    %168 = vmatpush1.msra.mxu0 %v134
    %169 = vmatprep.subr.mxu0 0.0
    %170 = vmatpush1.msra.mxu0 %v135
    %171 = vmatprep.subr.mxu0 0.0
    %172 = vmatpush1.msra.mxu0 %v136
    %173 = vmatprep.subr.mxu0 0.0
    %174 = vmatpush1.msra.mxu0 %v137
    %175 = vmatprep.subr.mxu0 0.0
    %176 = vmatpush1.msra.mxu0 %v138
    %177 = vmatprep.subr.mxu0 0.0
    %178 = vmatpush1.msra.mxu0 %v139
    %179 = vmatprep.subr.mxu0 0.0
    %180 = vmatpush1.msra.mxu0 %v140
    %181 = vmatprep.subr.mxu0 0.0
    %182 = vmatpush1.msra.mxu0 0.0
    %183 = vmatprep.subr.mxu0 0.0
    %184 = vmatpush1.msra.mxu0 0.0
    %185 = vmatprep.subr.mxu0 0.0
    %186 = vmatpush1.msra.mxu0 0.0
    %187 = vmatprep.subr.mxu0 0.0
    %188 = vmatpush1.msra.mxu0 0.0
    %189 = vmatprep.subr.mxu0 0.0
    %190 = vmatpush1.msra.mxu0 0.0
    %191 = vmatprep.subr.mxu0 0.0
    %192 = vmatpush1.msra.mxu0 0.0
    %193 = vmatprep.subr.mxu0 0.0
    %194 = vmatpush1.msra.mxu0 0.0
    %195 = vmatprep.subr.mxu0 0.0
    %196 = vmatpush1.msra.mxu0 0.0
    %197 = vmatprep.subr.mxu0 0.0
    %198 = vmatpush1.msra.mxu0 0.0
    %199 = vmatprep.subr.mxu0 0.0
    %200 = vmatpush1.msra.mxu0 0.0
    %201 = vmatprep.subr.mxu0 0.0
    %202 = vmatpush1.msra.mxu0 0.0
    %203 = vmatprep.subr.mxu0 0.0
    %204 = vmatpush1.msra.mxu0 0.0
    %205 = vmatprep.subr.mxu0 0.0
    %206 = vmatpush1.msra.mxu0 0.0
    %207 = vmatprep.subr.mxu0 0.0
    %208 = vmatpush1.msra.mxu0 0.0
    %209 = vmatprep.subr.mxu0 0.0
    %210 = vmatpush1.msra.mxu0 0.0
    %211 = vmatprep.subr.mxu0 0.0
    %212 = vmatpush1.msra.mxu0 0.0
    %213 = vmatprep.mubr.f32.mxu0 0.0
    %214 = vmatmul.mubr.f32.gmra.mrb[0].mxu0 %v123
    %v215 = vpop.f32.mrb[0].mxu0
    %v216 = vadd.f32 %v147, %v215
    %v217 = vpop.f32.mrb[0].mxu0
    %218 = vdwg.mxu0
    %v219 = vtanh.pop %v216
    %220 = vst [vmem:[#allocation5] sm:$0xff] %v219
    // Predicated region
    $region18: #{_forward_impl.1} parent=1 // pred_check
      _
    $region19: #{_forward_impl.1} parent=1 // pred_check_branch
      %222 = sbr.rel (0) target = $region21
    $region20: #{_forward_impl.1} parent=1 // pred_region
      %s224 = ssub.s32 128, 128
      %225 = vsyncadd [#allocation4], %s224
      %s227 = sshll.u32 [#allocation5], 4
      %s228 = int_to_ptr.vmem [resolvable:$true] %s227
      %230 = dma.vmem_to_hbm [thread:$0]  %s228, 128, %s3, [#allocation4]
    $region21: #{_forward_impl.1} parent=1 // pred_fallthru
      _
    // Predicated region
    $region22: #{_forward_impl.1} parent=1 // pred_check
      _
    $region23: #{_forward_impl.1} parent=1 // pred_check_branch
      %232 = sbr.rel (0) target = $region25
    $region24: #{_forward_impl.1} parent=1 // pred_region
      %233 = dma.done [#allocation4], 128
    $region25: #{_forward_impl.1} parent=1 // pred_fallthru
      _
    %234 = vsyncpa [#allocation3], 1
    %235 = vsyncpa [#allocation4], 1

</llo_original>
